<compile_context>
chip_gen: v5e
topology: v5e:2x2
jax: 0.10.0
libtpu: 0.0.40
codegen_flags: <defaults>
</compile_context>

<pallas_src>
import numpy as np
import jax
import jax.numpy as jnp
from jax.experimental import pallas as pl
from jax.experimental.pallas import tpu as pltpu

# ---- module hyper-parameters (synthetic, small) -----------------------------
WHITES_BY_AGG = 4
DIM_WHITE = 10
LANE = 128
S_BLK_MAX = 64            # max sublane-groups per tile (x block ~= 0.33 MB)


def build_groups(whites_by_aggregator, dim_white):
    """Replicates the partition hierarchy of HCI_2_add_2_layers_partition."""
    nb_inter = dim_white // whites_by_aggregator
    if dim_white % whites_by_aggregator:
        nb_inter += 1
    groups = []
    for i in range(nb_inter):
        lo = i * whites_by_aggregator
        hi = min((i + 1) * whites_by_aggregator, dim_white) - 1
        groups.append((lo, hi))          # inclusive bounds, like inputs_top_down
    return groups


GROUPS = build_groups(WHITES_BY_AGG, DIM_WHITE)
G = len(GROUPS)                          # number of intermediate aggregators


def n_params(n):
    # raw Choquet_2_add parameter count: singletons + min-pairs + max-pairs
    return n + n * (n - 1)


def n_eff(n):
    # folded parameter count: effective singletons + effective (min) pairs
    return n + n * (n - 1) // 2


W_EFF_MAX = max(n_eff(z1 - z0 + 1) for z0, z1 in GROUPS)


def fold_2add_weights(w, n):
    """Fold max-pair weights into singletons using min+max = a+b.

    Input ordering: [w_i (n), w_min_ij (npairs), w_max_ij (npairs)] with pairs
    enumerated i<j in nested-loop order.  Returns [w_i_eff (n), w_pair_eff
    (npairs)] where C(x) = sum_i w_i_eff x_i + sum_{i<j} w_pair_eff min(xi,xj).
    """
    w = np.asarray(w, np.float32)
    npairs = n * (n - 1) // 2
    s = w[:n].copy()
    mins = w[n:n + npairs]
    maxs = w[n + npairs:n + 2 * npairs]
    pair_eff = mins - maxs
    p = 0
    for i in range(n):
        for j in range(i + 1, n):
            s[i] += maxs[p]
            s[j] += maxs[p]
            p += 1
    return np.concatenate([s, pair_eff]).astype(np.float32)


# ---- Pallas kernel ----------------------------------------------------------
def hci_kernel(lw_ref, tw_ref, xt_ref, out_ref):
    """lw_ref : SMEM (G, W_EFF_MAX)      folded lower-level weights (padded)
       tw_ref : SMEM (n_eff(G),)         folded top-level weights
       xt_ref : VMEM (D, S_BLK, 128)     leaf inputs, batch on sublanes+lanes
       out_ref: VMEM (G+1, S_BLK, 128)   rows 0..G-1 = snz, row G = top
    """
    # lower level: one folded 2-additive Choquet per group (static, unrolled)
    rows = []
    for g, (z0, z1) in enumerate(GROUPS):
        n = z1 - z0 + 1
        xs = [xt_ref[z0 + i] for i in range(n)]          # each (S_BLK, 128)
        acc = lw_ref[g, 0] * xs[0]
        for i in range(1, n):
            acc = acc + lw_ref[g, i] * xs[i]
        p = 0
        for i in range(n):
            for j in range(i + 1, n):
                acc = acc + lw_ref[g, n + p] * jnp.minimum(xs[i], xs[j])
                p += 1
        out_ref[g] = acc                                  # dense unmasked store
        rows.append(acc)

    # top level: folded 2-additive Choquet over the G intermediate concepts
    top = tw_ref[0] * rows[0]
    for i in range(1, G):
        top = top + tw_ref[i] * rows[i]
    p = 0
    for i in range(G):
        for j in range(i + 1, G):
            top = top + tw_ref[G + p] * jnp.minimum(rows[i], rows[j])
            p += 1
    out_ref[G] = top


# ---- wrapper ----------------------------------------------------------------
def _tensorcores_per_chip():
    """Best-effort TC count: 2 on v7x, 1 on v5e/v6e (safe default: 1)."""
    try:
        dk = jax.devices()[0].device_kind.lower()
        if "v7" in dk or "7x" in dk:
            return 2
    except Exception:
        pass
    return 1


def _choose_sblk(S, n_cores):
    """Sublane-groups per block: single block unless megacore can split it
    evenly, then cap block size; all blocks stay multiples of 8 (or == S)."""
    blk = S
    if n_cores > 1 and S % (8 * n_cores) == 0:
        blk = S // n_cores                      # shard across TensorCores
    while blk > S_BLK_MAX and blk % 16 == 0:    # keep mult-of-8, divides S
        blk //= 2
    return blk


def hci_forward(x, lw_eff, tw_eff):
    """Batched forward, equivalent to HCI_2_add_2_layers_partition.forward."""
    B, D = x.shape
    assert D == DIM_WHITE

    Bp = pl.cdiv(B, LANE) * LANE
    S = Bp // LANE
    blk = _choose_sblk(S, _tensorcores_per_chip())
    grid = (S // blk,)

    if Bp != B:
        x = jnp.pad(x, ((0, Bp - B), (0, 0)))
    # batch on sublanes+lanes; under jit this fuses with surrounding ops.
    # TODO(synk): for very large B the transpose could move in-kernel (XLU).
    xt = x.T.reshape(D, S, LANE)

    out = pl.pallas_call(
        hci_kernel,
        out_shape=jax.ShapeDtypeStruct((G + 1, S, LANE), jnp.float32),
        grid=grid,
        in_specs=[
            pl.BlockSpec(memory_space=pltpu.MemorySpace.SMEM),  # lower weights
            pl.BlockSpec(memory_space=pltpu.MemorySpace.SMEM),  # top weights
            pl.BlockSpec((D, blk, LANE), lambda b: (0, b, 0)),  # x tile
        ],
        out_specs=pl.BlockSpec((G + 1, blk, LANE), lambda b: (0, b, 0)),
        compiler_params=pltpu.CompilerParams(
            dimension_semantics=("parallel",)),
    )(lw_eff, tw_eff, xt)

    out2 = out.reshape(G + 1, Bp)
    m = out2[:G, :B].T                                   # (B, G)  ("snz")
    top = out2[G, :B]                                    # (B,)
    return {"output": top, "snz": m}


# ---- pure-JAX reference (uses the ORIGINAL min/max weights) -----------------
def choquet_2add_ref(xg, w):
    n = xg.shape[1]
    npairs = n * (n - 1) // 2
    out = jnp.zeros((xg.shape[0],), jnp.float32)
    for i in range(n):
        out = out + w[i] * xg[:, i]
    p = 0
    for i in range(n):
        for j in range(i + 1, n):
            out = out + w[n + p] * jnp.minimum(xg[:, i], xg[:, j])
            out = out + w[n + npairs + p] * jnp.maximum(xg[:, i], xg[:, j])
            p += 1
    return out


def hci_forward_ref(x, lower_ws, tw):
    cols = [choquet_2add_ref(x[:, z0:z1 + 1], w)[:, None]
            for (z0, z1), w in zip(GROUPS, lower_ws)]
    m = jnp.concatenate(cols, axis=1)
    out = choquet_2add_ref(m, tw)
    return {"output": out, "snz": m}


# ---- main -------------------------------------------------------------------
if __name__ == "__main__":
    key = jax.random.PRNGKey(0)
    keys = jax.random.split(key, G + 3)

    # deterministic parameter init: raw params -> softmax ("attention") weights
    lower_ws = []
    lw_eff_np = np.zeros((G, W_EFF_MAX), np.float32)
    for g, (z0, z1) in enumerate(GROUPS):
        n = z1 - z0 + 1
        theta = jax.random.normal(keys[g], (n_params(n),), jnp.float32)
        w = jax.nn.softmax(theta)
        lower_ws.append(w)
        we = fold_2add_weights(np.asarray(w), n)
        lw_eff_np[g, :we.shape[0]] = we
    lw_eff = jnp.asarray(lw_eff_np)

    theta_top = jax.random.normal(keys[G], (n_params(G),), jnp.float32)
    tw = jax.nn.softmax(theta_top)
    tw_eff = jnp.asarray(fold_2add_weights(np.asarray(tw), G))

    fwd = jax.jit(hci_forward)

    # case 1: batch a multiple of 128 (several sublane groups)
    B = 1024
    x = jax.random.uniform(keys[G + 1], (B, DIM_WHITE), jnp.float32)
    res = fwd(x, lw_eff, tw_eff)
    jax.block_until_ready(res["output"])
    jax.block_until_ready(res["snz"])
    ref = hci_forward_ref(x, lower_ws, tw)
    np.testing.assert_allclose(np.asarray(res["snz"]), np.asarray(ref["snz"]),
                               rtol=1e-5, atol=1e-5)
    np.testing.assert_allclose(np.asarray(res["output"]),
                               np.asarray(ref["output"]), rtol=1e-5, atol=1e-5)

    # case 2: ragged batch (exercises the lane-padding path)
    B2 = 100
    x2 = jax.random.uniform(keys[G + 2], (B2, DIM_WHITE), jnp.float32)
    res2 = fwd(x2, lw_eff, tw_eff)
    jax.block_until_ready(res2["output"])
    ref2 = hci_forward_ref(x2, lower_ws, tw)
    np.testing.assert_allclose(np.asarray(res2["snz"]), np.asarray(ref2["snz"]),
                               rtol=1e-5, atol=1e-5)
    np.testing.assert_allclose(np.asarray(res2["output"]),
                               np.asarray(ref2["output"]), rtol=1e-5, atol=1e-5)

    print("KERNEL_OK")
</pallas_src>

<mosaic_0001>
module attributes {stable_mosaic.version = 11 : i64} {
  func.func @hci_kernel(%arg0: i32, %arg1: memref<3x10xf32, #tpu.memory_space<smem>>, %arg2: memref<6xf32, #tpu.memory_space<smem>>, %arg3: memref<10x8x128xf32, #tpu.memory_space<vmem>>, %arg4: memref<4x8x128xf32, #tpu.memory_space<vmem>>) attributes {dimension_semantics = [#tpu.dimension_semantics<parallel>], iteration_bounds = array<i64: 1>, scalar_prefetch = 0 : i64, scratch_operands = 0 : i64, tpu.core_type = #tpu.core_type<tc>, window_params = [{transform_indices = @transform_0, window_bounds = array<i64: 3, 10>}, {transform_indices = @transform_1, window_bounds = array<i64: 6>}, {transform_indices = @transform_2, window_bounds = array<i64: 10, 8, 128>}, {transform_indices = @transform_3, window_bounds = array<i64: 4, 8, 128>}]} {
    %c0 = arith.constant 0 : index
    %c0_0 = arith.constant 0 : index
    %c0_1 = arith.constant 0 : index
    %0 = vector.load %arg3[%c0, %c0_0, %c0_1] : memref<10x8x128xf32, #tpu.memory_space<vmem>>, vector<1x8x128xf32>
    %1 = vector.shape_cast %0 : vector<1x8x128xf32> to vector<8x128xf32>
    %c1 = arith.constant 1 : index
    %c0_2 = arith.constant 0 : index
    %c0_3 = arith.constant 0 : index
    %2 = vector.load %arg3[%c1, %c0_2, %c0_3] : memref<10x8x128xf32, #tpu.memory_space<vmem>>, vector<1x8x128xf32>
    %3 = vector.shape_cast %2 : vector<1x8x128xf32> to vector<8x128xf32>
    %c2 = arith.constant 2 : index
    %c0_4 = arith.constant 0 : index
    %c0_5 = arith.constant 0 : index
    %4 = vector.load %arg3[%c2, %c0_4, %c0_5] : memref<10x8x128xf32, #tpu.memory_space<vmem>>, vector<1x8x128xf32>
    %5 = vector.shape_cast %4 : vector<1x8x128xf32> to vector<8x128xf32>
    %c3 = arith.constant 3 : index
    %c0_6 = arith.constant 0 : index
    %c0_7 = arith.constant 0 : index
    %6 = vector.load %arg3[%c3, %c0_6, %c0_7] : memref<10x8x128xf32, #tpu.memory_space<vmem>>, vector<1x8x128xf32>
    %7 = vector.shape_cast %6 : vector<1x8x128xf32> to vector<8x128xf32>
    %c0_8 = arith.constant 0 : index
    %c0_9 = arith.constant 0 : index
    %8 = memref.load %arg1[%c0_8, %c0_9] : memref<3x10xf32, #tpu.memory_space<smem>>
    %9 = vector.broadcast %8 : f32 to vector<8x128xf32>
    %10 = arith.mulf %9, %1 : vector<8x128xf32>
    %c0_10 = arith.constant 0 : index
    %c1_11 = arith.constant 1 : index
    %11 = memref.load %arg1[%c0_10, %c1_11] : memref<3x10xf32, #tpu.memory_space<smem>>
    %12 = vector.broadcast %11 : f32 to vector<8x128xf32>
    %13 = arith.mulf %12, %3 : vector<8x128xf32>
    %14 = arith.addf %10, %13 : vector<8x128xf32>
    %c0_12 = arith.constant 0 : index
    %c2_13 = arith.constant 2 : index
    %15 = memref.load %arg1[%c0_12, %c2_13] : memref<3x10xf32, #tpu.memory_space<smem>>
    %16 = vector.broadcast %15 : f32 to vector<8x128xf32>
    %17 = arith.mulf %16, %5 : vector<8x128xf32>
    %18 = arith.addf %14, %17 : vector<8x128xf32>
    %c0_14 = arith.constant 0 : index
    %c3_15 = arith.constant 3 : index
    %19 = memref.load %arg1[%c0_14, %c3_15] : memref<3x10xf32, #tpu.memory_space<smem>>
    %20 = vector.broadcast %19 : f32 to vector<8x128xf32>
    %21 = arith.mulf %20, %7 : vector<8x128xf32>
    %22 = arith.addf %18, %21 : vector<8x128xf32>
    %c0_16 = arith.constant 0 : index
    %c4 = arith.constant 4 : index
    %23 = memref.load %arg1[%c0_16, %c4] : memref<3x10xf32, #tpu.memory_space<smem>>
    %24 = arith.minimumf %1, %3 : vector<8x128xf32>
    %25 = vector.broadcast %23 : f32 to vector<8x128xf32>
    %26 = arith.mulf %25, %24 : vector<8x128xf32>
    %27 = arith.addf %22, %26 : vector<8x128xf32>
    %c0_17 = arith.constant 0 : index
    %c5 = arith.constant 5 : index
    %28 = memref.load %arg1[%c0_17, %c5] : memref<3x10xf32, #tpu.memory_space<smem>>
    %29 = arith.minimumf %1, %5 : vector<8x128xf32>
    %30 = vector.broadcast %28 : f32 to vector<8x128xf32>
    %31 = arith.mulf %30, %29 : vector<8x128xf32>
    %32 = arith.addf %27, %31 : vector<8x128xf32>
    %c0_18 = arith.constant 0 : index
    %c6 = arith.constant 6 : index
    %33 = memref.load %arg1[%c0_18, %c6] : memref<3x10xf32, #tpu.memory_space<smem>>
    %34 = arith.minimumf %1, %7 : vector<8x128xf32>
    %35 = vector.broadcast %33 : f32 to vector<8x128xf32>
    %36 = arith.mulf %35, %34 : vector<8x128xf32>
    %37 = arith.addf %32, %36 : vector<8x128xf32>
    %c0_19 = arith.constant 0 : index
    %c7 = arith.constant 7 : index
    %38 = memref.load %arg1[%c0_19, %c7] : memref<3x10xf32, #tpu.memory_space<smem>>
    %39 = arith.minimumf %3, %5 : vector<8x128xf32>
    %40 = vector.broadcast %38 : f32 to vector<8x128xf32>
    %41 = arith.mulf %40, %39 : vector<8x128xf32>
    %42 = arith.addf %37, %41 : vector<8x128xf32>
    %c0_20 = arith.constant 0 : index
    %c8 = arith.constant 8 : index
    %43 = memref.load %arg1[%c0_20, %c8] : memref<3x10xf32, #tpu.memory_space<smem>>
    %44 = arith.minimumf %3, %7 : vector<8x128xf32>
    %45 = vector.broadcast %43 : f32 to vector<8x128xf32>
    %46 = arith.mulf %45, %44 : vector<8x128xf32>
    %47 = arith.addf %42, %46 : vector<8x128xf32>
    %c0_21 = arith.constant 0 : index
    %c9 = arith.constant 9 : index
    %48 = memref.load %arg1[%c0_21, %c9] : memref<3x10xf32, #tpu.memory_space<smem>>
    %49 = arith.minimumf %5, %7 : vector<8x128xf32>
    %50 = vector.broadcast %48 : f32 to vector<8x128xf32>
    %51 = arith.mulf %50, %49 : vector<8x128xf32>
    %52 = arith.addf %47, %51 : vector<8x128xf32>
    %c0_22 = arith.constant 0 : index
    %c0_23 = arith.constant 0 : index
    %c0_24 = arith.constant 0 : index
    %53 = vector.load %arg4[%c0_22, %c0_23, %c0_24] : memref<4x8x128xf32, #tpu.memory_space<vmem>>, vector<1x8x128xf32>
    %54 = vector.shape_cast %53 : vector<1x8x128xf32> to vector<8x128xf32>
    %55 = vector.shape_cast %52 : vector<8x128xf32> to vector<1x8x128xf32>
    tpu.vector_store %arg4[%c0_22, %c0_23, %c0_24], %55 {strides = array<i32>} : memref<4x8x128xf32, #tpu.memory_space<vmem>>, vector<1x8x128xf32>,
    %c4_25 = arith.constant 4 : index
    %c0_26 = arith.constant 0 : index
    %c0_27 = arith.constant 0 : index
    %56 = vector.load %arg3[%c4_25, %c0_26, %c0_27] : memref<10x8x128xf32, #tpu.memory_space<vmem>>, vector<1x8x128xf32>
    %57 = vector.shape_cast %56 : vector<1x8x128xf32> to vector<8x128xf32>
    %c5_28 = arith.constant 5 : index
    %c0_29 = arith.constant 0 : index
    %c0_30 = arith.constant 0 : index
    %58 = vector.load %arg3[%c5_28, %c0_29, %c0_30] : memref<10x8x128xf32, #tpu.memory_space<vmem>>, vector<1x8x128xf32>
    %59 = vector.shape_cast %58 : vector<1x8x128xf32> to vector<8x128xf32>
    %c6_31 = arith.constant 6 : index
    %c0_32 = arith.constant 0 : index
    %c0_33 = arith.constant 0 : index
    %60 = vector.load %arg3[%c6_31, %c0_32, %c0_33] : memref<10x8x128xf32, #tpu.memory_space<vmem>>, vector<1x8x128xf32>
    %61 = vector.shape_cast %60 : vector<1x8x128xf32> to vector<8x128xf32>
    %c7_34 = arith.constant 7 : index
    %c0_35 = arith.constant 0 : index
    %c0_36 = arith.constant 0 : index
    %62 = vector.load %arg3[%c7_34, %c0_35, %c0_36] : memref<10x8x128xf32, #tpu.memory_space<vmem>>, vector<1x8x128xf32>
    %63 = vector.shape_cast %62 : vector<1x8x128xf32> to vector<8x128xf32>
    %c1_37 = arith.constant 1 : index
    %c0_38 = arith.constant 0 : index
    %64 = memref.load %arg1[%c1_37, %c0_38] : memref<3x10xf32, #tpu.memory_space<smem>>
    %65 = vector.broadcast %64 : f32 to vector<8x128xf32>
    %66 = arith.mulf %65, %57 : vector<8x128xf32>
    %c1_39 = arith.constant 1 : index
    %c1_40 = arith.constant 1 : index
    %67 = memref.load %arg1[%c1_39, %c1_40] : memref<3x10xf32, #tpu.memory_space<smem>>
    %68 = vector.broadcast %67 : f32 to vector<8x128xf32>
    %69 = arith.mulf %68, %59 : vector<8x128xf32>
    %70 = arith.addf %66, %69 : vector<8x128xf32>
    %c1_41 = arith.constant 1 : index
    %c2_42 = arith.constant 2 : index
    %71 = memref.load %arg1[%c1_41, %c2_42] : memref<3x10xf32, #tpu.memory_space<smem>>
    %72 = vector.broadcast %71 : f32 to vector<8x128xf32>
    %73 = arith.mulf %72, %61 : vector<8x128xf32>
    %74 = arith.addf %70, %73 : vector<8x128xf32>
    %c1_43 = arith.constant 1 : index
    %c3_44 = arith.constant 3 : index
    %75 = memref.load %arg1[%c1_43, %c3_44] : memref<3x10xf32, #tpu.memory_space<smem>>
    %76 = vector.broadcast %75 : f32 to vector<8x128xf32>
    %77 = arith.mulf %76, %63 : vector<8x128xf32>
    %78 = arith.addf %74, %77 : vector<8x128xf32>
    %c1_45 = arith.constant 1 : index
    %c4_46 = arith.constant 4 : index
    %79 = memref.load %arg1[%c1_45, %c4_46] : memref<3x10xf32, #tpu.memory_space<smem>>
    %80 = arith.minimumf %57, %59 : vector<8x128xf32>
    %81 = vector.broadcast %79 : f32 to vector<8x128xf32>
    %82 = arith.mulf %81, %80 : vector<8x128xf32>
    %83 = arith.addf %78, %82 : vector<8x128xf32>
    %c1_47 = arith.constant 1 : index
    %c5_48 = arith.constant 5 : index
    %84 = memref.load %arg1[%c1_47, %c5_48] : memref<3x10xf32, #tpu.memory_space<smem>>
    %85 = arith.minimumf %57, %61 : vector<8x128xf32>
    %86 = vector.broadcast %84 : f32 to vector<8x128xf32>
    %87 = arith.mulf %86, %85 : vector<8x128xf32>
    %88 = arith.addf %83, %87 : vector<8x128xf32>
    %c1_49 = arith.constant 1 : index
    %c6_50 = arith.constant 6 : index
    %89 = memref.load %arg1[%c1_49, %c6_50] : memref<3x10xf32, #tpu.memory_space<smem>>
    %90 = arith.minimumf %57, %63 : vector<8x128xf32>
    %91 = vector.broadcast %89 : f32 to vector<8x128xf32>
    %92 = arith.mulf %91, %90 : vector<8x128xf32>
    %93 = arith.addf %88, %92 : vector<8x128xf32>
    %c1_51 = arith.constant 1 : index
    %c7_52 = arith.constant 7 : index
    %94 = memref.load %arg1[%c1_51, %c7_52] : memref<3x10xf32, #tpu.memory_space<smem>>
    %95 = arith.minimumf %59, %61 : vector<8x128xf32>
    %96 = vector.broadcast %94 : f32 to vector<8x128xf32>
    %97 = arith.mulf %96, %95 : vector<8x128xf32>
    %98 = arith.addf %93, %97 : vector<8x128xf32>
    %c1_53 = arith.constant 1 : index
    %c8_54 = arith.constant 8 : index
    %99 = memref.load %arg1[%c1_53, %c8_54] : memref<3x10xf32, #tpu.memory_space<smem>>
    %100 = arith.minimumf %59, %63 : vector<8x128xf32>
    %101 = vector.broadcast %99 : f32 to vector<8x128xf32>
    %102 = arith.mulf %101, %100 : vector<8x128xf32>
    %103 = arith.addf %98, %102 : vector<8x128xf32>
    %c1_55 = arith.constant 1 : index
    %c9_56 = arith.constant 9 : index
    %104 = memref.load %arg1[%c1_55, %c9_56] : memref<3x10xf32, #tpu.memory_space<smem>>
    %105 = arith.minimumf %61, %63 : vector<8x128xf32>
    %106 = vector.broadcast %104 : f32 to vector<8x128xf32>
    %107 = arith.mulf %106, %105 : vector<8x128xf32>
    %108 = arith.addf %103, %107 : vector<8x128xf32>
    %c1_57 = arith.constant 1 : index
    %c0_58 = arith.constant 0 : index
    %c0_59 = arith.constant 0 : index
    %109 = vector.load %arg4[%c1_57, %c0_58, %c0_59] : memref<4x8x128xf32, #tpu.memory_space<vmem>>, vector<1x8x128xf32>
    %110 = vector.shape_cast %109 : vector<1x8x128xf32> to vector<8x128xf32>
    %111 = vector.shape_cast %108 : vector<8x128xf32> to vector<1x8x128xf32>
    tpu.vector_store %arg4[%c1_57, %c0_58, %c0_59], %111 {strides = array<i32>} : memref<4x8x128xf32, #tpu.memory_space<vmem>>, vector<1x8x128xf32>,
    %c8_60 = arith.constant 8 : index
    %c0_61 = arith.constant 0 : index
    %c0_62 = arith.constant 0 : index
    %112 = vector.load %arg3[%c8_60, %c0_61, %c0_62] : memref<10x8x128xf32, #tpu.memory_space<vmem>>, vector<1x8x128xf32>
    %113 = vector.shape_cast %112 : vector<1x8x128xf32> to vector<8x128xf32>
    %c9_63 = arith.constant 9 : index
    %c0_64 = arith.constant 0 : index
    %c0_65 = arith.constant 0 : index
    %114 = vector.load %arg3[%c9_63, %c0_64, %c0_65] : memref<10x8x128xf32, #tpu.memory_space<vmem>>, vector<1x8x128xf32>
    %115 = vector.shape_cast %114 : vector<1x8x128xf32> to vector<8x128xf32>
    %c2_66 = arith.constant 2 : index
    %c0_67 = arith.constant 0 : index
    %116 = memref.load %arg1[%c2_66, %c0_67] : memref<3x10xf32, #tpu.memory_space<smem>>
    %117 = vector.broadcast %116 : f32 to vector<8x128xf32>
    %118 = arith.mulf %117, %113 : vector<8x128xf32>
    %c2_68 = arith.constant 2 : index
    %c1_69 = arith.constant 1 : index
    %119 = memref.load %arg1[%c2_68, %c1_69] : memref<3x10xf32, #tpu.memory_space<smem>>
    %120 = vector.broadcast %119 : f32 to vector<8x128xf32>
    %121 = arith.mulf %120, %115 : vector<8x128xf32>
    %122 = arith.addf %118, %121 : vector<8x128xf32>
    %c2_70 = arith.constant 2 : index
    %c2_71 = arith.constant 2 : index
    %123 = memref.load %arg1[%c2_70, %c2_71] : memref<3x10xf32, #tpu.memory_space<smem>>
    %124 = arith.minimumf %113, %115 : vector<8x128xf32>
    %125 = vector.broadcast %123 : f32 to vector<8x128xf32>
    %126 = arith.mulf %125, %124 : vector<8x128xf32>
    %127 = arith.addf %122, %126 : vector<8x128xf32>
    %c2_72 = arith.constant 2 : index
    %c0_73 = arith.constant 0 : index
    %c0_74 = arith.constant 0 : index
    %128 = vector.load %arg4[%c2_72, %c0_73, %c0_74] : memref<4x8x128xf32, #tpu.memory_space<vmem>>, vector<1x8x128xf32>
    %129 = vector.shape_cast %128 : vector<1x8x128xf32> to vector<8x128xf32>
    %130 = vector.shape_cast %127 : vector<8x128xf32> to vector<1x8x128xf32>
    tpu.vector_store %arg4[%c2_72, %c0_73, %c0_74], %130 {strides = array<i32>} : memref<4x8x128xf32, #tpu.memory_space<vmem>>, vector<1x8x128xf32>,
    %c0_75 = arith.constant 0 : index
    %131 = memref.load %arg2[%c0_75] : memref<6xf32, #tpu.memory_space<smem>>
    %132 = vector.broadcast %131 : f32 to vector<8x128xf32>
    %133 = arith.mulf %132, %52 : vector<8x128xf32>
    %c1_76 = arith.constant 1 : index
    %134 = memref.load %arg2[%c1_76] : memref<6xf32, #tpu.memory_space<smem>>
    %135 = vector.broadcast %134 : f32 to vector<8x128xf32>
    %136 = arith.mulf %135, %108 : vector<8x128xf32>
    %137 = arith.addf %133, %136 : vector<8x128xf32>
    %c2_77 = arith.constant 2 : index
    %138 = memref.load %arg2[%c2_77] : memref<6xf32, #tpu.memory_space<smem>>
    %139 = vector.broadcast %138 : f32 to vector<8x128xf32>
    %140 = arith.mulf %139, %127 : vector<8x128xf32>
    %141 = arith.addf %137, %140 : vector<8x128xf32>
    %c3_78 = arith.constant 3 : index
    %142 = memref.load %arg2[%c3_78] : memref<6xf32, #tpu.memory_space<smem>>
    %143 = arith.minimumf %52, %108 : vector<8x128xf32>
    %144 = vector.broadcast %142 : f32 to vector<8x128xf32>
    %145 = arith.mulf %144, %143 : vector<8x128xf32>
    %146 = arith.addf %141, %145 : vector<8x128xf32>
    %c4_79 = arith.constant 4 : index
    %147 = memref.load %arg2[%c4_79] : memref<6xf32, #tpu.memory_space<smem>>
    %148 = arith.minimumf %52, %127 : vector<8x128xf32>
    %149 = vector.broadcast %147 : f32 to vector<8x128xf32>
    %150 = arith.mulf %149, %148 : vector<8x128xf32>
    %151 = arith.addf %146, %150 : vector<8x128xf32>
    %c5_80 = arith.constant 5 : index
    %152 = memref.load %arg2[%c5_80] : memref<6xf32, #tpu.memory_space<smem>>
    %153 = arith.minimumf %108, %127 : vector<8x128xf32>
    %154 = vector.broadcast %152 : f32 to vector<8x128xf32>
    %155 = arith.mulf %154, %153 : vector<8x128xf32>
    %156 = arith.addf %151, %155 : vector<8x128xf32>
    %c3_81 = arith.constant 3 : index
    %c0_82 = arith.constant 0 : index
    %c0_83 = arith.constant 0 : index
    %157 = vector.load %arg4[%c3_81, %c0_82, %c0_83] : memref<4x8x128xf32, #tpu.memory_space<vmem>>, vector<1x8x128xf32>
    %158 = vector.shape_cast %157 : vector<1x8x128xf32> to vector<8x128xf32>
    %159 = vector.shape_cast %156 : vector<8x128xf32> to vector<1x8x128xf32>
    tpu.vector_store %arg4[%c3_81, %c0_82, %c0_83], %159 {strides = array<i32>} : memref<4x8x128xf32, #tpu.memory_space<vmem>>, vector<1x8x128xf32>,
    return
  }
  func.func @transform_0(%arg0: i32) -> (i32, i32) {
    %c0_i32 = arith.constant 0 : i32
    %c0_i32_0 = arith.constant 0 : i32
    %c0_i32_1 = arith.constant 0 : i32
    return %c0_i32, %c0_i32_0 : i32, i32
  }
  func.func @transform_1(%arg0: i32) -> i32 {
    %c0_i32 = arith.constant 0 : i32
    %c0_i32_0 = arith.constant 0 : i32
    return %c0_i32 : i32
  }
  func.func @transform_2(%arg0: i32) -> (i32, i32, i32) {
    %c0_i32 = arith.constant 0 : i32
    %c0_i32_0 = arith.constant 0 : i32
    %c0_i32_1 = arith.constant 0 : i32
    return %c0_i32, %arg0, %c0_i32_0 : i32, i32, i32
  }
  func.func @transform_3(%arg0: i32) -> (i32, i32, i32) {
    %c0_i32 = arith.constant 0 : i32
    %c0_i32_0 = arith.constant 0 : i32
    %c0_i32_1 = arith.constant 0 : i32
    return %c0_i32, %arg0, %c0_i32_0 : i32, i32, i32
  }
}

</mosaic_0001>

<llo_original>
// kernel: hci_forward.1
$region0: #{hci_forward.1}
  #allocation0 [shape = 'u32[]', space=smem, size = 0x4, offset = 0x4, fixed_abs, tag = 'smem constant byte address 0x4 - core index']
  #allocation1 [shape = 'u32[72,128]{1,0:T(1,128)}', space=vmem, size = 0x9000, scoped, tag = 'internal scratch']
  %s0 = inlined_call_operand.vmem [shape: f32[3,10], index: 0, kind: input, shape index: {}]
  %s1 = inlined_call_operand.vmem [shape: f32[6], index: 1, kind: input, shape index: {}]
  %s2 = inlined_call_operand.vmem [shape: f32[10,8,128], index: 2, kind: input, shape index: {}]
  %s3 = inlined_call_operand.vmem [shape: f32[4,8,128], index: 3, kind: output, shape index: {}]
  %s4 = sld [smem:[#allocation0]]
  $region30: #{hci_forward.1} parent=0
    _
  %s6 = ssub.s32 1, %s4
  %s7 = scalar_select 0, %s6, %s4
  $region1: #{hci_forward.1} parent=0
    #allocation2 [shape = 'u8[2048]{0}', space=smem, size = 0x800, scoped, tag = 'input window, operand 0, single buffered']
    #allocation3 [shape = 's32[1]{0}', space=sflag, size = 0x4, scoped, tag = 'scoped memory for hci_forward.1']
    #allocation4 [shape = 'u8[512]{0}', space=smem, size = 0x200, scoped, tag = 'input window, operand 1, single buffered']
    #allocation5 [shape = 's32[1]{0}', space=sflag, size = 0x4, scoped, tag = 'scoped memory for hci_forward.1']
    %8 = vsyncpa [#allocation3], 0
    %9 = vsyncpa [#allocation5], 0
    // Predicated region
    $region2: #{hci_forward.1} parent=1 // pred_check
      _
    $region3: #{hci_forward.1} parent=1 // pred_check_branch
      %11 = sbr.rel (0) target = $region5
    $region4: #{hci_forward.1} parent=1 // pred_region
      %13 = vsyncadd [#allocation3], 0
      %s15 = sshll.u32 %s0, 4
      %s16 = int_to_ptr.vmem [resolvable:$true] %s15
      %18 = dma.vmem_to_smem %s16, 64, [#allocation2], [#allocation3]
    $region5: #{hci_forward.1} parent=1 // pred_fallthru
      _
    // Predicated region
    $region6: #{hci_forward.1} parent=1 // pred_check
      _
    $region7: #{hci_forward.1} parent=1 // pred_check_branch
      %20 = sbr.rel (0) target = $region9
    $region8: #{hci_forward.1} parent=1 // pred_region
      %22 = vsyncadd [#allocation5], 0
      %s24 = sshll.u32 %s1, 4
      %s25 = int_to_ptr.vmem [resolvable:$true] %s24
      %27 = dma.vmem_to_smem %s25, 16, [#allocation4], [#allocation5]
    $region9: #{hci_forward.1} parent=1 // pred_fallthru
      _
    // Predicated region
    $region10: #{hci_forward.1} parent=1 // pred_check
      _
    $region11: #{hci_forward.1} parent=1 // pred_check_branch
      %29 = sbr.rel (0) target = $region13
    $region12: #{hci_forward.1} parent=1 // pred_region
      _
    $region13: #{hci_forward.1} parent=1 // pred_fallthru
      _
    // Predicated region
    $region14: #{hci_forward.1} parent=1 // pred_check
      _
    $region15: #{hci_forward.1} parent=1 // pred_check_branch
      %31 = sbr.rel (0) target = $region17
    $region16: #{hci_forward.1} parent=1 // pred_region
      %33 = dma.done [#allocation3], 64
    $region17: #{hci_forward.1} parent=1 // pred_fallthru
      _
    // Predicated region
    $region18: #{hci_forward.1} parent=1 // pred_check
      _
    $region19: #{hci_forward.1} parent=1 // pred_check_branch
      %35 = sbr.rel (0) target = $region21
    $region20: #{hci_forward.1} parent=1 // pred_region
      %37 = dma.done [#allocation5], 16
    $region21: #{hci_forward.1} parent=1 // pred_fallthru
      _
    %38 = sfence
    %v39 = vld [vmem:[%s2] sm:$0xff]
    %s40 = scalar_lea.vmem %s2, 8
    %v41 = vld [vmem:[%s40] sm:$0xff]
    %s42 = scalar_lea.vmem %s2, 16
    %v43 = vld [vmem:[%s42] sm:$0xff]
    %s44 = scalar_lea.vmem %s2, 24
    %v45 = vld [vmem:[%s44] sm:$0xff]
    %s46 = sld [smem:[#allocation2]]
    %v47 = vstv %s46
    %v48 = vmul.f32 %v47, %v39
    %s49 = sld [smem:[#allocation2 + $0x1]]
    %v50 = vstv %s49
    %v51 = vmul.f32 %v50, %v41
    %v52 = vadd.f32 %v48, %v51
    %s53 = sld [smem:[#allocation2 + $0x2]]
    %v54 = vstv %s53
    %v55 = vmul.f32 %v54, %v43
    %v56 = vadd.f32 %v52, %v55
    %s57 = sld [smem:[#allocation2 + $0x3]]
    %v58 = vstv %s57
    %v59 = vmul.f32 %v58, %v45
    %v60 = vadd.f32 %v56, %v59
    %s61 = sld [smem:[#allocation2 + $0x4]]
    %v62 = vmin.f32 %v39, %v41
    %v63 = vstv %s61
    %v64 = vmul.f32 %v63, %v62
    %v65 = vadd.f32 %v60, %v64
    %s66 = sld [smem:[#allocation2 + $0x5]]
    %v67 = vmin.f32 %v39, %v43
    %v68 = vstv %s66
    %v69 = vmul.f32 %v68, %v67
    %v70 = vadd.f32 %v65, %v69
    %s71 = sld [smem:[#allocation2 + $0x6]]
    %v72 = vmin.f32 %v39, %v45
    %v73 = vstv %s71
    %v74 = vmul.f32 %v73, %v72
    %v75 = vadd.f32 %v70, %v74
    %s76 = sld [smem:[#allocation2 + $0x7]]
    %v77 = vmin.f32 %v41, %v43
    %v78 = vstv %s76
    %v79 = vmul.f32 %v78, %v77
    %v80 = vadd.f32 %v75, %v79
    %s81 = sld [smem:[#allocation2 + $0x8]]
    %v82 = vmin.f32 %v41, %v45
    %v83 = vstv %s81
    %v84 = vmul.f32 %v83, %v82
    %v85 = vadd.f32 %v80, %v84
    %s86 = sld [smem:[#allocation2 + $0x9]]
    %v87 = vmin.f32 %v43, %v45
    %v88 = vstv %s86
    %v89 = vmul.f32 %v88, %v87
    %v90 = vadd.f32 %v85, %v89
    %91 = vst [vmem:[%s3] sm:$0xff] %v90
    %s92 = scalar_lea.vmem %s2, 32
    %v93 = vld [vmem:[%s92] sm:$0xff]
    %s94 = scalar_lea.vmem %s2, 40
    %v95 = vld [vmem:[%s94] sm:$0xff]
    %s96 = scalar_lea.vmem %s2, 48
    %v97 = vld [vmem:[%s96] sm:$0xff]
    %s98 = scalar_lea.vmem %s2, 56
    %v99 = vld [vmem:[%s98] sm:$0xff]
    %s100 = sld [smem:[#allocation2 + $0x80]]
    %v101 = vstv %s100
    %v102 = vmul.f32 %v101, %v93
    %s103 = sld [smem:[#allocation2 + $0x81]]
    %v104 = vstv %s103
    %v105 = vmul.f32 %v104, %v95
    %v106 = vadd.f32 %v102, %v105
    %s107 = sld [smem:[#allocation2 + $0x82]]
    %v108 = vstv %s107
    %v109 = vmul.f32 %v108, %v97
    %v110 = vadd.f32 %v106, %v109
    %s111 = sld [smem:[#allocation2 + $0x83]]
    %v112 = vstv %s111
    %v113 = vmul.f32 %v112, %v99
    %v114 = vadd.f32 %v110, %v113
    %s115 = sld [smem:[#allocation2 + $0x84]]
    %v116 = vmin.f32 %v93, %v95
    %v117 = vstv %s115
    %v118 = vmul.f32 %v117, %v116
    %v119 = vadd.f32 %v114, %v118
    %s120 = sld [smem:[#allocation2 + $0x85]]
    %v121 = vmin.f32 %v93, %v97
    %v122 = vstv %s120
    %v123 = vmul.f32 %v122, %v121
    %v124 = vadd.f32 %v119, %v123
    %s125 = sld [smem:[#allocation2 + $0x86]]
    %v126 = vmin.f32 %v93, %v99
    %v127 = vstv %s125
    %v128 = vmul.f32 %v127, %v126
    %v129 = vadd.f32 %v124, %v128
    %s130 = sld [smem:[#allocation2 + $0x87]]
    %v131 = vmin.f32 %v95, %v97
    %v132 = vstv %s130
    %v133 = vmul.f32 %v132, %v131
    %v134 = vadd.f32 %v129, %v133
    %s135 = sld [smem:[#allocation2 + $0x88]]
    %v136 = vmin.f32 %v95, %v99
    %v137 = vstv %s135
    %v138 = vmul.f32 %v137, %v136
    %v139 = vadd.f32 %v134, %v138
    %s140 = sld [smem:[#allocation2 + $0x89]]
    %v141 = vmin.f32 %v97, %v99
    %v142 = vstv %s140
    %v143 = vmul.f32 %v142, %v141
    %v144 = vadd.f32 %v139, %v143
    %s145 = scalar_lea.vmem %s3, 8
    %146 = vst [vmem:[%s145] sm:$0xff] %v144
    %s147 = scalar_lea.vmem %s2, 64
    %v148 = vld [vmem:[%s147] sm:$0xff]
    %s149 = scalar_lea.vmem %s2, 72
    %v150 = vld [vmem:[%s149] sm:$0xff]
    %s151 = sld [smem:[#allocation2 + $0x100]]
    %v152 = vstv %s151
    %v153 = vmul.f32 %v152, %v148
    %s154 = sld [smem:[#allocation2 + $0x101]]
    %v155 = vstv %s154
    %v156 = vmul.f32 %v155, %v150
    %v157 = vadd.f32 %v153, %v156
    %s158 = sld [smem:[#allocation2 + $0x102]]
    %v159 = vmin.f32 %v148, %v150
    %v160 = vstv %s158
    %v161 = vmul.f32 %v160, %v159
    %v162 = vadd.f32 %v157, %v161
    %s163 = scalar_lea.vmem %s3, 16
    %164 = vst [vmem:[%s163] sm:$0xff] %v162
    %s165 = sld [smem:[#allocation4]]
    %v166 = vstv %s165
    %v167 = vmul.f32 %v166, %v90
    %s168 = sld [smem:[#allocation4 + $0x1]]
    %v169 = vstv %s168
    %v170 = vmul.f32 %v169, %v144
    %v171 = vadd.f32 %v167, %v170
    %s172 = sld [smem:[#allocation4 + $0x2]]
    %v173 = vstv %s172
    %v174 = vmul.f32 %v173, %v162
    %v175 = vadd.f32 %v171, %v174
    %s176 = sld [smem:[#allocation4 + $0x3]]
    %v177 = vmin.f32 %v90, %v144
    %v178 = vstv %s176
    %v179 = vmul.f32 %v178, %v177
    %v180 = vadd.f32 %v175, %v179
    %s181 = sld [smem:[#allocation4 + $0x4]]
    %v182 = vmin.f32 %v90, %v162
    %v183 = vstv %s181
    %v184 = vmul.f32 %v183, %v182
    %v185 = vadd.f32 %v180, %v184
    %s186 = sld [smem:[#allocation4 + $0x5]]
    %v187 = vmin.f32 %v144, %v162
    %v188 = vstv %s186
    %v189 = vmul.f32 %v188, %v187
    %v190 = vadd.f32 %v185, %v189
    %s191 = scalar_lea.vmem %s3, 24
    %192 = vst [vmem:[%s191] sm:$0xff] %v190
    // Predicated region
    $region22: #{hci_forward.1} parent=1 // pred_check
      _
    $region23: #{hci_forward.1} parent=1 // pred_check_branch
      %194 = sbr.rel (0) target = $region25
    $region24: #{hci_forward.1} parent=1 // pred_region
      _
    $region25: #{hci_forward.1} parent=1 // pred_fallthru
      _
    // Predicated region
    $region26: #{hci_forward.1} parent=1 // pred_check
      _
    $region27: #{hci_forward.1} parent=1 // pred_check_branch
      %196 = sbr.rel (0) target = $region29
    $region28: #{hci_forward.1} parent=1 // pred_region
      _
    $region29: #{hci_forward.1} parent=1 // pred_fallthru
      _
    %197 = vsyncpa [#allocation3], 1
    %198 = vsyncpa [#allocation5], 1

</llo_original>
